<compile_context>
chip_gen: v7x
topology: tpu7x:2x2x1
jax: 0.10.0
libtpu: 0.0.40
codegen_flags: <defaults>
</compile_context>

<pallas_src>
import functools

import jax
import jax.numpy as jnp
from jax.experimental import pallas as pl
from jax.experimental.pallas import tpu as pltpu


def _tlstm_cell_kernel(
    x_ref,       # (TM, I)    input row tile
    h_ref,       # (TM, H)    hidden row tile
    ddt_ref,     # (TM, H)    decayed_delta_t row tile
    c_ref,       # (TM, H)    cell state row tile
    wi_ref,      # (I, 4H)    i2h weight, transposed, bf16 (VMEM resident)
    wh_ref,      # (H, 4H)    h2h weight, transposed, bf16 (VMEM resident)
    bg_ref,      # (1, 4H)    fused gate bias (bi + bh), f32
    wc_ref,      # (H, H)     c2s weight, transposed, bf16
    bc_ref,      # (1, H)     c2s bias, f32
    h_out_ref,   # (TM, H)
    c_out_ref,   # (TM, H)
):
    H = c_ref.shape[1]

    cell = c_ref[...].astype(jnp.float32)
    ddt = ddt_ref[...].astype(jnp.float32)

    # c2s: tanh(cell @ Wc^T + bc) -- bf16 MXU operands, f32 accumulate.
    cell_short = jnp.tanh(
        jnp.dot(c_ref[...].astype(jnp.bfloat16), wc_ref[...],
                preferred_element_type=jnp.float32)
        + bc_ref[...]
    )
    # cell - cs + cs*ddt  ==  cell + cs*(ddt - 1)   (one fewer VPU op/elem)
    cell_new = cell + cell_short * (ddt - 1.0)

    # Fused gate matmul: two bf16 MXU pushes into one f32 accumulator
    # (replaces the old host-side [x|h] concat + single dot).
    gates = (
        jnp.dot(x_ref[...].astype(jnp.bfloat16), wi_ref[...],
                preferred_element_type=jnp.float32)
        + jnp.dot(h_ref[...].astype(jnp.bfloat16), wh_ref[...],
                  preferred_element_type=jnp.float32)
        + bg_ref[...]
    )

    # H is a multiple of 128 in the intended configuration -> lane-aligned
    # slices, no XLU relayout.  Nonlinearities stay f32 (v5e EUP has no bf16).
    ingate = jax.nn.sigmoid(gates[:, 0 * H:1 * H])
    forgate = jax.nn.sigmoid(gates[:, 1 * H:2 * H])
    cellgate = jnp.tanh(gates[:, 2 * H:3 * H])
    outgate = jax.nn.sigmoid(gates[:, 3 * H:4 * H])

    cell_output = forgate * cell_new + ingate * cellgate
    hidden_output = outgate * jnp.tanh(cell_output)

    h_out_ref[...] = hidden_output.astype(h_out_ref.dtype)
    c_out_ref[...] = cell_output.astype(c_out_ref.dtype)


def prepare_tlstm_params(params):
    """One-time parameter packing, hoisted out of the per-step call path.

    * Transposes i2h / h2h / c2s weights for `x @ W` form and stores them in
      bf16 (MXU-native; halves weight HBM traffic and VMEM footprint).
    * Pre-sums the two gate biases (kept f32, added post-accumulation).
    """
    return {
        "w_i2h_t": params["w_i2h"].T.astype(jnp.bfloat16),   # (I, 4H)
        "w_h2h_t": params["w_h2h"].T.astype(jnp.bfloat16),   # (H, 4H)
        "b_gates": (params["b_i2h"] + params["b_h2h"])[None, :].astype(jnp.float32),
        "w_c2s_t": params["w_c2s"].T.astype(jnp.bfloat16),   # (H, H)
        "b_c2s": params["b_c2s"][None, :].astype(jnp.float32),
    }


def _round_up(a, m):
    return ((a + m - 1) // m) * m


def _resident_spec(rows, cols):
    """Constant-index weight block: single-buffered (it never changes)."""
    try:
        return pl.BlockSpec((rows, cols), lambda i: (0, 0),
                            pipeline_mode=pl.Buffered(1))
    except TypeError:  # older jax without pipeline_mode kwarg
        return pl.BlockSpec((rows, cols), lambda i: (0, 0))


@functools.partial(jax.jit, static_argnames=("block_b",))
def tlstm_cell(x, ddt, hidden, cell, packed, block_b=256):
    """TLSTMCell forward: returns (hidden_output, cell_output)."""
    B, I = x.shape
    H = hidden.shape[1]

    # Batch row-tile size.  Force >= 2 grid steps when B allows so the second
    # TensorCore on v7x gets work (no-op on single-TC v5e/v6e).
    tm = min(block_b, _round_up(B, 8))
    if pl.cdiv(B, tm) == 1 and B >= 16:
        tm = _round_up(pl.cdiv(B, 2), 8)
    grid = (pl.cdiv(B, tm),)

    act_itemsize = jnp.dtype(x.dtype).itemsize
    w_itemsize = 2  # bf16 weights
    resident_bytes = ((I + H) * 4 * H + H * H) * w_itemsize + (4 * H + H) * 4
    streamed_bytes = tm * (I + 3 * H) * act_itemsize + 2 * tm * H * act_itemsize

    # Generation-conditional VMEM budget (v5e/v6e: 128 MiB, v7x: 64 MiB).
    try:
        vmem_cap = int(pltpu.get_tpu_info().vmem_capacity_bytes)
    except Exception:
        vmem_cap = 64 * 1024 * 1024
    vmem_budget = int(vmem_cap * 0.75)
    vmem_limit = int(min(max(resident_bytes + 2 * streamed_bytes + (8 << 20),
                             32 * 1024 * 1024),
                         vmem_budget))

    cost = pl.CostEstimate(
        flops=2 * B * (I + H) * 4 * H + 2 * B * H * H + 12 * B * H,
        transcendentals=6 * B * H,
        bytes_accessed=(B * (I + 3 * H) * act_itemsize          # streamed in
                        + 2 * B * H * act_itemsize               # streamed out
                        + ((I + H) * 4 * H + H * H) * w_itemsize # weights
                        + (4 * H + H) * 4),                      # biases
    )

    row_spec = lambda cols: pl.BlockSpec((tm, cols), lambda i: (i, 0))

    out_shapes = (
        jax.ShapeDtypeStruct((B, H), x.dtype),
        jax.ShapeDtypeStruct((B, H), x.dtype),
    )

    h_out, c_out = pl.pallas_call(
        _tlstm_cell_kernel,
        out_shape=out_shapes,
        grid=grid,
        in_specs=[
            row_spec(I),                        # x
            row_spec(H),                        # hidden
            row_spec(H),                        # decayed_delta_t
            row_spec(H),                        # cell
            _resident_spec(I, 4 * H),           # i2h weight (bf16)
            _resident_spec(H, 4 * H),           # h2h weight (bf16)
            _resident_spec(1, 4 * H),           # fused gate bias
            _resident_spec(H, H),               # c2s weight (bf16)
            _resident_spec(1, H),               # c2s bias
        ],
        out_specs=(row_spec(H), row_spec(H)),
        compiler_params=pltpu.CompilerParams(
            dimension_semantics=("parallel",),
            vmem_limit_bytes=vmem_limit,
        ),
        cost_estimate=cost,
    )(x, hidden, ddt, cell,
      packed["w_i2h_t"], packed["w_h2h_t"], packed["b_gates"],
      packed["w_c2s_t"], packed["b_c2s"])
    return h_out, c_out


def tlstm_cell_ref(x, ddt, hidden, cell, params):
    """Pure-JAX reference mirroring the PyTorch forward."""
    cell_short = jnp.tanh(cell @ params["w_c2s"].T + params["b_c2s"])
    cell_new = cell - cell_short + cell_short * ddt
    gates = (x @ params["w_i2h"].T + params["b_i2h"]
             + hidden @ params["w_h2h"].T + params["b_h2h"])
    H = hidden.shape[1]
    ingate = jax.nn.sigmoid(gates[:, 0 * H:1 * H])
    forgate = jax.nn.sigmoid(gates[:, 1 * H:2 * H])
    cellgate = jnp.tanh(gates[:, 2 * H:3 * H])
    outgate = jax.nn.sigmoid(gates[:, 3 * H:4 * H])
    cell_output = forgate * cell_new + ingate * cellgate
    hidden_output = outgate * jnp.tanh(cell_output)
    return hidden_output, cell_output


if __name__ == "__main__":
    # I = H = 128 keeps both MXU contraction widths aligned and every gate
    # slice / output lane-dense; B = 16 splits into two 8-row tiles (v7x's
    # second TensorCore gets work, no padded tail).
    B, I, H = 16, 128, 128
    key = jax.random.PRNGKey(0)
    ks = jax.random.split(key, 10)

    x = jax.random.normal(ks[0], (B, I), jnp.float32)
    ddt = jax.random.uniform(ks[1], (B, H), jnp.float32)
    hidden = jax.random.normal(ks[2], (B, H), jnp.float32)
    cell = jax.random.normal(ks[3], (B, H), jnp.float32)

    # Deterministic synthetic parameters (PyTorch nn.Linear shapes: (out, in)).
    params = {
        "w_c2s": jax.random.normal(ks[4], (H, H), jnp.float32) * 0.1,
        "b_c2s": jax.random.normal(ks[5], (H,), jnp.float32) * 0.1,
        "w_i2h": jax.random.normal(ks[6], (4 * H, I), jnp.float32) * 0.1,
        "b_i2h": jax.random.normal(ks[7], (4 * H,), jnp.float32) * 0.1,
        "w_h2h": jax.random.normal(ks[8], (4 * H, H), jnp.float32) * 0.1,
        "b_h2h": jax.random.normal(ks[9], (4 * H,), jnp.float32) * 0.1,
    }

    # One-time packing (would live at module init / param load time).
    packed = prepare_tlstm_params(params)

    h_out, c_out = tlstm_cell(x, ddt, hidden, cell, packed)
    jax.block_until_ready((h_out, c_out))

    h_ref, c_ref = tlstm_cell_ref(x, ddt, hidden, cell, params)
    # bf16 matmul operands with f32 accumulation: loosen tolerance vs pure-f32.
    assert jnp.allclose(h_out, h_ref, atol=3e-2, rtol=3e-2), "hidden mismatch"
    assert jnp.allclose(c_out, c_ref, atol=3e-2, rtol=3e-2), "cell mismatch"

    print("KERNEL_OK")
</pallas_src>

<mosaic_0001>
module attributes {stable_mosaic.version = 11 : i64} {
  func.func @_tlstm_cell_kernel(%arg0: i32, %arg1: memref<8x128xf32, #tpu.memory_space<vmem>>, %arg2: memref<8x128xf32, #tpu.memory_space<vmem>>, %arg3: memref<8x128xf32, #tpu.memory_space<vmem>>, %arg4: memref<8x128xf32, #tpu.memory_space<vmem>>, %arg5: memref<128x512xbf16, #tpu.memory_space<vmem>>, %arg6: memref<128x512xbf16, #tpu.memory_space<vmem>>, %arg7: memref<1x512xf32, #tpu.memory_space<vmem>>, %arg8: memref<128x128xbf16, #tpu.memory_space<vmem>>, %arg9: memref<1x128xf32, #tpu.memory_space<vmem>>, %arg10: memref<8x128xf32, #tpu.memory_space<vmem>>, %arg11: memref<8x128xf32, #tpu.memory_space<vmem>>) attributes {dimension_semantics = [#tpu.dimension_semantics<parallel>], iteration_bounds = array<i64: 2>, scalar_prefetch = 0 : i64, scratch_operands = 0 : i64, tpu.core_type = #tpu.core_type<tc>, window_params = [{transform_indices = @transform_0, window_bounds = array<i64: 8, 128>}, {transform_indices = @transform_1, window_bounds = array<i64: 8, 128>}, {transform_indices = @transform_2, window_bounds = array<i64: 8, 128>}, {transform_indices = @transform_3, window_bounds = array<i64: 8, 128>}, {pipeline_mode = #tpu.pipeline_mode<synchronous>, transform_indices = @transform_4, window_bounds = array<i64: 128, 512>}, {pipeline_mode = #tpu.pipeline_mode<synchronous>, transform_indices = @transform_5, window_bounds = array<i64: 128, 512>}, {pipeline_mode = #tpu.pipeline_mode<synchronous>, transform_indices = @transform_6, window_bounds = array<i64: 1, 512>}, {pipeline_mode = #tpu.pipeline_mode<synchronous>, transform_indices = @transform_7, window_bounds = array<i64: 128, 128>}, {pipeline_mode = #tpu.pipeline_mode<synchronous>, transform_indices = @transform_8, window_bounds = array<i64: 1, 128>}, {transform_indices = @transform_9, window_bounds = array<i64: 8, 128>}, {transform_indices = @transform_10, window_bounds = array<i64: 8, 128>}]} {
    %c0 = arith.constant 0 : index
    %c0_0 = arith.constant 0 : index
    %0 = vector.load %arg4[%c0, %c0_0] : memref<8x128xf32, #tpu.memory_space<vmem>>, vector<8x128xf32>
    %c0_1 = arith.constant 0 : index
    %c0_2 = arith.constant 0 : index
    %1 = vector.load %arg3[%c0_1, %c0_2] : memref<8x128xf32, #tpu.memory_space<vmem>>, vector<8x128xf32>
    %c0_3 = arith.constant 0 : index
    %c0_4 = arith.constant 0 : index
    %2 = vector.load %arg4[%c0_3, %c0_4] : memref<8x128xf32, #tpu.memory_space<vmem>>, vector<8x128xf32>
    %3 = arith.truncf %2 : vector<8x128xf32> to vector<8x128xbf16>
    %c0_5 = arith.constant 0 : index
    %c0_6 = arith.constant 0 : index
    %4 = vector.load %arg8[%c0_5, %c0_6] : memref<128x128xbf16, #tpu.memory_space<vmem>>, vector<128x128xbf16>
    %cst = arith.constant dense<0.000000e+00> : vector<8x128xf32>
    %5 = tpu.matmul %3, %4, %cst {dimension_numbers = #tpu.dot_dimension_numbers<[1], [0], [0], [1], [0, 0, 1, 1], [], []>} : vector<8x128xbf16>, vector<128x128xbf16>, vector<8x128xf32> -> vector<8x128xf32>
    %c0_7 = arith.constant 0 : index
    %c0_8 = arith.constant 0 : index
    %6 = vector.load %arg9[%c0_7, %c0_8] : memref<1x128xf32, #tpu.memory_space<vmem>>, vector<1x128xf32>
    %7 = vector.broadcast %6 : vector<1x128xf32> to vector<8x128xf32>
    %8 = arith.addf %5, %7 : vector<8x128xf32>
    %9 = math.tanh %8 : vector<8x128xf32>
    %cst_9 = arith.constant 1.000000e+00 : f32
    %10 = vector.broadcast %cst_9 : f32 to vector<8x128xf32>
    %11 = arith.subf %1, %10 : vector<8x128xf32>
    %12 = arith.mulf %9, %11 : vector<8x128xf32>
    %13 = arith.addf %0, %12 : vector<8x128xf32>
    %c0_10 = arith.constant 0 : index
    %c0_11 = arith.constant 0 : index
    %14 = vector.load %arg1[%c0_10, %c0_11] : memref<8x128xf32, #tpu.memory_space<vmem>>, vector<8x128xf32>
    %15 = arith.truncf %14 : vector<8x128xf32> to vector<8x128xbf16>
    %c0_12 = arith.constant 0 : index
    %c0_13 = arith.constant 0 : index
    %16 = vector.load %arg5[%c0_12, %c0_13] : memref<128x512xbf16, #tpu.memory_space<vmem>>, vector<128x512xbf16>
    %cst_14 = arith.constant dense<0.000000e+00> : vector<8x512xf32>
    %17 = tpu.matmul %15, %16, %cst_14 {dimension_numbers = #tpu.dot_dimension_numbers<[1], [0], [0], [1], [0, 0, 1, 1], [], []>} : vector<8x128xbf16>, vector<128x512xbf16>, vector<8x512xf32> -> vector<8x512xf32>
    %c0_15 = arith.constant 0 : index
    %c0_16 = arith.constant 0 : index
    %18 = vector.load %arg2[%c0_15, %c0_16] : memref<8x128xf32, #tpu.memory_space<vmem>>, vector<8x128xf32>
    %19 = arith.truncf %18 : vector<8x128xf32> to vector<8x128xbf16>
    %c0_17 = arith.constant 0 : index
    %c0_18 = arith.constant 0 : index
    %20 = vector.load %arg6[%c0_17, %c0_18] : memref<128x512xbf16, #tpu.memory_space<vmem>>, vector<128x512xbf16>
    %cst_19 = arith.constant dense<0.000000e+00> : vector<8x512xf32>
    %21 = tpu.matmul %19, %20, %cst_19 {dimension_numbers = #tpu.dot_dimension_numbers<[1], [0], [0], [1], [0, 0, 1, 1], [], []>} : vector<8x128xbf16>, vector<128x512xbf16>, vector<8x512xf32> -> vector<8x512xf32>
    %22 = arith.addf %17, %21 : vector<8x512xf32>
    %c0_20 = arith.constant 0 : index
    %c0_21 = arith.constant 0 : index
    %23 = vector.load %arg7[%c0_20, %c0_21] : memref<1x512xf32, #tpu.memory_space<vmem>>, vector<1x512xf32>
    %24 = vector.broadcast %23 : vector<1x512xf32> to vector<8x512xf32>
    %25 = arith.addf %22, %24 : vector<8x512xf32>
    %26 = vector.extract_strided_slice %25 {offsets = [0, 0], sizes = [8, 128], strides = [1, 1]} : vector<8x512xf32> to vector<8x128xf32>
    %27 = arith.negf %26 : vector<8x128xf32>
    %28 = math.exp %27 : vector<8x128xf32>
    %cst_22 = arith.constant 1.000000e+00 : f32
    %29 = vector.broadcast %cst_22 : f32 to vector<8x128xf32>
    %30 = arith.addf %29, %28 : vector<8x128xf32>
    %31 = arith.divf %29, %30 : vector<8x128xf32>
    %32 = vector.extract_strided_slice %25 {offsets = [0, 128], sizes = [8, 128], strides = [1, 1]} : vector<8x512xf32> to vector<8x128xf32>
    %33 = arith.negf %32 : vector<8x128xf32>
    %34 = math.exp %33 : vector<8x128xf32>
    %cst_23 = arith.constant 1.000000e+00 : f32
    %35 = vector.broadcast %cst_23 : f32 to vector<8x128xf32>
    %36 = arith.addf %35, %34 : vector<8x128xf32>
    %37 = arith.divf %35, %36 : vector<8x128xf32>
    %38 = vector.extract_strided_slice %25 {offsets = [0, 256], sizes = [8, 128], strides = [1, 1]} : vector<8x512xf32> to vector<8x128xf32>
    %39 = math.tanh %38 : vector<8x128xf32>
    %40 = vector.extract_strided_slice %25 {offsets = [0, 384], sizes = [8, 128], strides = [1, 1]} : vector<8x512xf32> to vector<8x128xf32>
    %41 = arith.negf %40 : vector<8x128xf32>
    %42 = math.exp %41 : vector<8x128xf32>
    %cst_24 = arith.constant 1.000000e+00 : f32
    %43 = vector.broadcast %cst_24 : f32 to vector<8x128xf32>
    %44 = arith.addf %43, %42 : vector<8x128xf32>
    %45 = arith.divf %43, %44 : vector<8x128xf32>
    %46 = arith.mulf %37, %13 : vector<8x128xf32>
    %47 = arith.mulf %31, %39 : vector<8x128xf32>
    %48 = arith.addf %46, %47 : vector<8x128xf32>
    %49 = math.tanh %48 : vector<8x128xf32>
    %50 = arith.mulf %45, %49 : vector<8x128xf32>
    %c0_25 = arith.constant 0 : index
    %c0_26 = arith.constant 0 : index
    %51 = vector.load %arg10[%c0_25, %c0_26] : memref<8x128xf32, #tpu.memory_space<vmem>>, vector<8x128xf32>
    tpu.vector_store %arg10[%c0_25, %c0_26], %50 {strides = array<i32>} : memref<8x128xf32, #tpu.memory_space<vmem>>, vector<8x128xf32>,
    %c0_27 = arith.constant 0 : index
    %c0_28 = arith.constant 0 : index
    %52 = vector.load %arg11[%c0_27, %c0_28] : memref<8x128xf32, #tpu.memory_space<vmem>>, vector<8x128xf32>
    tpu.vector_store %arg11[%c0_27, %c0_28], %48 {strides = array<i32>} : memref<8x128xf32, #tpu.memory_space<vmem>>, vector<8x128xf32>,
    return
  }
  func.func @transform_0(%arg0: i32) -> (i32, i32) {
    %c0_i32 = arith.constant 0 : i32
    %c0_i32_0 = arith.constant 0 : i32
    return %arg0, %c0_i32 : i32, i32
  }
  func.func @transform_1(%arg0: i32) -> (i32, i32) {
    %c0_i32 = arith.constant 0 : i32
    %c0_i32_0 = arith.constant 0 : i32
    return %arg0, %c0_i32 : i32, i32
  }
  func.func @transform_2(%arg0: i32) -> (i32, i32) {
    %c0_i32 = arith.constant 0 : i32
    %c0_i32_0 = arith.constant 0 : i32
    return %arg0, %c0_i32 : i32, i32
  }
  func.func @transform_3(%arg0: i32) -> (i32, i32) {
    %c0_i32 = arith.constant 0 : i32
    %c0_i32_0 = arith.constant 0 : i32
    return %arg0, %c0_i32 : i32, i32
  }
  func.func @transform_4(%arg0: i32) -> (i32, i32) {
    %c0_i32 = arith.constant 0 : i32
    %c0_i32_0 = arith.constant 0 : i32
    %c0_i32_1 = arith.constant 0 : i32
    return %c0_i32, %c0_i32_0 : i32, i32
  }
  func.func @transform_5(%arg0: i32) -> (i32, i32) {
    %c0_i32 = arith.constant 0 : i32
    %c0_i32_0 = arith.constant 0 : i32
    %c0_i32_1 = arith.constant 0 : i32
    return %c0_i32, %c0_i32_0 : i32, i32
  }
  func.func @transform_6(%arg0: i32) -> (i32, i32) {
    %c0_i32 = arith.constant 0 : i32
    %c0_i32_0 = arith.constant 0 : i32
    %c0_i32_1 = arith.constant 0 : i32
    return %c0_i32, %c0_i32_0 : i32, i32
  }
  func.func @transform_7(%arg0: i32) -> (i32, i32) {
    %c0_i32 = arith.constant 0 : i32
    %c0_i32_0 = arith.constant 0 : i32
    %c0_i32_1 = arith.constant 0 : i32
    return %c0_i32, %c0_i32_0 : i32, i32
  }
  func.func @transform_8(%arg0: i32) -> (i32, i32) {
    %c0_i32 = arith.constant 0 : i32
    %c0_i32_0 = arith.constant 0 : i32
    %c0_i32_1 = arith.constant 0 : i32
    return %c0_i32, %c0_i32_0 : i32, i32
  }
  func.func @transform_9(%arg0: i32) -> (i32, i32) {
    %c0_i32 = arith.constant 0 : i32
    %c0_i32_0 = arith.constant 0 : i32
    return %arg0, %c0_i32 : i32, i32
  }
  func.func @transform_10(%arg0: i32) -> (i32, i32) {
    %c0_i32 = arith.constant 0 : i32
    %c0_i32_0 = arith.constant 0 : i32
    return %arg0, %c0_i32 : i32, i32
  }
}

</mosaic_0001>

<llo_original>
// kernel: tlstm_cell.1
$region0: #{tlstm_cell.1}
  #allocation0 [shape = 'u32[]', space=smem, size = 0x4, offset = 0x4, fixed_abs, tag = 'smem constant byte address 0x4 - core index']
  #allocation1 [shape = 'u32[144,128]{1,0:T(1,128)}', space=vmem, size = 0x12000, scoped, tag = 'internal scratch']
  %s0 = inlined_call_operand.hbm [shape: f32[16,128], index: 0, kind: input, shape index: {}]
  %s1 = inlined_call_operand.hbm [shape: f32[16,128], index: 1, kind: input, shape index: {}]
  %s2 = inlined_call_operand.hbm [shape: f32[16,128], index: 2, kind: input, shape index: {}]
  %s3 = inlined_call_operand.hbm [shape: f32[16,128], index: 3, kind: input, shape index: {}]
  %s4 = inlined_call_operand.hbm [shape: bf16[128,512], index: 4, kind: input, shape index: {}]
  %s5 = inlined_call_operand.hbm [shape: bf16[128,512], index: 5, kind: input, shape index: {}]
  %s6 = inlined_call_operand.vmem [shape: f32[1,512], index: 6, kind: input, shape index: {}]
  %s7 = inlined_call_operand.hbm [shape: bf16[128,128], index: 7, kind: input, shape index: {}]
  %s8 = inlined_call_operand.vmem [shape: f32[1,128], index: 8, kind: input, shape index: {}]
  %s9 = inlined_call_operand.hbm [shape: f32[16,128], index: 9, kind: output, shape index: {0}]
  %s10 = inlined_call_operand.hbm [shape: f32[16,128], index: 10, kind: output, shape index: {1}]
  %11 = xla_tuple %s9, %s10
  %s12 = sld [smem:[#allocation0]]
  $region105: #{tlstm_cell.1} parent=0
    _
  %s14 = ssub.s32 1, %s12
  %s15 = scalar_select 0, %s14, %s12
  $region1: #{tlstm_cell.1} parent=0
    #allocation2 [shape = 'u8[8192]{0}', space=vmem, size = 0x2000, scoped, tag = 'input window, operand 0']
    #allocation3 [shape = 's32[2]{0}', space=sflag, size = 0x8, scoped, tag = 'scoped memory for tlstm_cell.1']
    #allocation4 [shape = 's32[2]{0}', space=sflag, size = 0x8, scoped, tag = 'scoped memory for tlstm_cell.1']
    #allocation5 [shape = 'u8[8192]{0}', space=vmem, size = 0x2000, scoped, tag = 'input window, operand 1']
    #allocation6 [shape = 's32[2]{0}', space=sflag, size = 0x8, scoped, tag = 'scoped memory for tlstm_cell.1']
    #allocation7 [shape = 'u8[8192]{0}', space=vmem, size = 0x2000, scoped, tag = 'input window, operand 2']
    #allocation8 [shape = 'u8[8192]{0}', space=vmem, size = 0x2000, scoped, tag = 'input window, operand 3']
    #allocation9 [shape = 's32[2]{0}', space=sflag, size = 0x8, scoped, tag = 'scoped memory for tlstm_cell.1']
    #allocation10 [shape = 'u8[131072]{0}', space=vmem, size = 0x20000, scoped, tag = 'input window, operand 4, single buffered']
    #allocation11 [shape = 'u8[131072]{0}', space=vmem, size = 0x20000, scoped, tag = 'input window, operand 5, single buffered']
    #allocation12 [shape = 's32[1]{0}', space=sflag, size = 0x4, scoped, tag = 'scoped memory for tlstm_cell.1']
    #allocation13 [shape = 'u8[32768]{0}', space=vmem, size = 0x8000, scoped, tag = 'input window, operand 7, single buffered']
    #allocation14 [shape = 'u8[8192]{0}', space=vmem, size = 0x2000, scoped, tag = 'output window, operand 0']
    #allocation15 [shape = 'u8[8192]{0}', space=vmem, size = 0x2000, scoped, tag = 'output window, operand 1']
    #allocation16 [shape = 's32[2]{0}', space=sflag, size = 0x8, scoped, tag = 'scoped memory for tlstm_cell.1']
    %16 = vsyncpa [#allocation3], 0
    %s17 = scalar_lea.sflag [#allocation3], 1
    %18 = vsyncpa %s17, 0
    %19 = vsyncpa [#allocation6], 0
    %s20 = scalar_lea.sflag [#allocation6], 1
    %21 = vsyncpa %s20, 0
    %22 = vsyncpa [#allocation9], 0
    %s23 = scalar_lea.sflag [#allocation9], 1
    %24 = vsyncpa %s23, 0
    %25 = vsyncpa [#allocation12], 0
    %26 = vsyncpa [#allocation4], 0
    %s27 = scalar_lea.sflag [#allocation4], 1
    %28 = vsyncpa %s27, 0
    %29 = vsyncpa [#allocation16], 0
    %s30 = scalar_lea.sflag [#allocation16], 1
    %31 = vsyncpa %s30, 0
    loop: start=0, step=1, limit=4
    $region2: #{tlstm_cell.1} parent=1 // loop_pre_header
      _
    $region3: #{tlstm_cell.1} parent=1 // loop_header
      %s33 = sphi 0, %s37
      %p34 = scmp.ge.s32.totalorder %s33, 4
      %s43 = sphi 0, %s45
      %s46 = sphi 0, %s43
      %s47 = sphi 0, %s46
      %s63 = sphi 0, %s47
      %s69 = sphi 0, %s71
      %s72 = sphi 0, %s69
      %s73 = sphi 0, %s72
      %s89 = sphi 0, %s73
      %s95 = sphi 0, %s97
      %s98 = sphi 0, %s95
      %s99 = sphi 0, %s98
      %s115 = sphi 0, %s99
      %s121 = sphi 0, %s123
      %s124 = sphi 0, %s121
      %s125 = sphi 0, %s124
      %s141 = sphi 0, %s125
      %s145 = sphi 0, %s145
      %s147 = sphi 0, %s145
      %s148 = sphi 0, %s147
      %s162 = sphi 0, %s148
      %s166 = sphi 0, %s166
      %s168 = sphi 0, %s166
      %s169 = sphi 0, %s168
      %s183 = sphi 0, %s169
      %s187 = sphi 0, %s187
      %s189 = sphi 0, %s187
      %s190 = sphi 0, %s189
      %s204 = sphi 0, %s190
      %s208 = sphi 0, %s208
      %s210 = sphi 0, %s208
      %s211 = sphi 0, %s210
      %s225 = sphi 0, %s211
      %s229 = sphi 0, %s229
      %s231 = sphi 0, %s229
      %s232 = sphi 0, %s231
      %s246 = sphi 0, %s232
      %s252 = sphi 0, %s254
      %s255 = sphi 0, %s252
      %s256 = sphi 0, %s255
      %s272 = sphi 0, %s256
      %s278 = sphi 0, %s280
      %s281 = sphi 0, %s278
      %s282 = sphi 0, %s281
      %s298 = sphi 0, %s282
    $region4: #{tlstm_cell.1} parent=1 // loop_header_branch
      %36 = sbr.rel (%p34) target = $region8
    $region5: #{tlstm_cell.1} parent=1 // loop_body
      %s38 = ssub.s32 %s33, 1
      %s39 = ssub.s32 %s33, 2
      %s40 = sadd.s32 %s33, 1
      %s41 = ssub.s32 %s33, %s40
      %p42 = scmp.eq.s32.totalorder %s41, 0
      %s44 = sadd.s32 %s43, 1
      %s45 = scalar_select %p42, %s43, %s44
      %p48 = pneg %p42
      %p49 = scmp.eq.s32.totalorder %s33, 1
      %p50 = por %p48, %p49
      %p51 = scmp.ne.s32.totalorder %s43, %s46
      %p52 = scmp.eq.s32.totalorder %s33, 0
      %p53 = por %p51, %p52
      %p54 = scmp.ne.s32.totalorder %s43, %s46
      %p55 = scmp.eq.s32.totalorder %s38, 1
      %p56 = por %p54, %p55
      %p57 = scmp.ne.s32.totalorder %s46, %s47
      %p58 = scmp.eq.s32.totalorder %s38, 0
      %p59 = por %p57, %p58
      %p60 = scmp.ne.s32.totalorder %s46, %s47
      %p61 = scmp.eq.s32.totalorder %s39, 1
      %p62 = por %p60, %p61
      %p64 = scmp.ne.s32.totalorder %s47, %s63
      %p65 = scmp.eq.s32.totalorder %s39, 0
      %p66 = por %p64, %p65
      %s67 = ssub.s32 %s33, %s40
      %p68 = scmp.eq.s32.totalorder %s67, 0
      %s70 = sadd.s32 %s69, 1
      %s71 = scalar_select %p68, %s69, %s70
      %p74 = pneg %p68
      %p75 = scmp.eq.s32.totalorder %s33, 1
      %p76 = por %p74, %p75
      %p77 = scmp.ne.s32.totalorder %s69, %s72
      %p78 = scmp.eq.s32.totalorder %s33, 0
      %p79 = por %p77, %p78
      %p80 = scmp.ne.s32.totalorder %s69, %s72
      %p81 = scmp.eq.s32.totalorder %s38, 1
      %p82 = por %p80, %p81
      %p83 = scmp.ne.s32.totalorder %s72, %s73
      %p84 = scmp.eq.s32.totalorder %s38, 0
      %p85 = por %p83, %p84
      %p86 = scmp.ne.s32.totalorder %s72, %s73
      %p87 = scmp.eq.s32.totalorder %s39, 1
      %p88 = por %p86, %p87
      %p90 = scmp.ne.s32.totalorder %s73, %s89
      %p91 = scmp.eq.s32.totalorder %s39, 0
      %p92 = por %p90, %p91
      %s93 = ssub.s32 %s33, %s40
      %p94 = scmp.eq.s32.totalorder %s93, 0
      %s96 = sadd.s32 %s95, 1
      %s97 = scalar_select %p94, %s95, %s96
      %p100 = pneg %p94
      %p101 = scmp.eq.s32.totalorder %s33, 1
      %p102 = por %p100, %p101
      %p103 = scmp.ne.s32.totalorder %s95, %s98
      %p104 = scmp.eq.s32.totalorder %s33, 0
      %p105 = por %p103, %p104
      %p106 = scmp.ne.s32.totalorder %s95, %s98
      %p107 = scmp.eq.s32.totalorder %s38, 1
      %p108 = por %p106, %p107
      %p109 = scmp.ne.s32.totalorder %s98, %s99
      %p110 = scmp.eq.s32.totalorder %s38, 0
      %p111 = por %p109, %p110
      %p112 = scmp.ne.s32.totalorder %s98, %s99
      %p113 = scmp.eq.s32.totalorder %s39, 1
      %p114 = por %p112, %p113
      %p116 = scmp.ne.s32.totalorder %s99, %s115
      %p117 = scmp.eq.s32.totalorder %s39, 0
      %p118 = por %p116, %p117
      %s119 = ssub.s32 %s33, %s40
      %p120 = scmp.eq.s32.totalorder %s119, 0
      %s122 = sadd.s32 %s121, 1
      %s123 = scalar_select %p120, %s121, %s122
      %p126 = pneg %p120
      %p127 = scmp.eq.s32.totalorder %s33, 1
      %p128 = por %p126, %p127
      %p129 = scmp.ne.s32.totalorder %s121, %s124
      %p130 = scmp.eq.s32.totalorder %s33, 0
      %p131 = por %p129, %p130
      %p132 = scmp.ne.s32.totalorder %s121, %s124
      %p133 = scmp.eq.s32.totalorder %s38, 1
      %p134 = por %p132, %p133
      %p135 = scmp.ne.s32.totalorder %s124, %s125
      %p136 = scmp.eq.s32.totalorder %s38, 0
      %p137 = por %p135, %p136
      %p138 = scmp.ne.s32.totalorder %s124, %s125
      %p139 = scmp.eq.s32.totalorder %s39, 1
      %p140 = por %p138, %p139
      %p142 = scmp.ne.s32.totalorder %s125, %s141
      %p143 = scmp.eq.s32.totalorder %s39, 0
      %p144 = por %p142, %p143
      %s146 = sadd.s32 %s145, 1
      %p149 = scmp.eq.s32.totalorder %s33, 1
      %p150 = scmp.ne.s32.totalorder %s145, %s147
      %p151 = scmp.eq.s32.totalorder %s33, 0
      %p152 = por %p150, %p151
      %p153 = scmp.ne.s32.totalorder %s145, %s147
      %p154 = scmp.eq.s32.totalorder %s38, 1
      %p155 = por %p153, %p154
      %p156 = scmp.ne.s32.totalorder %s147, %s148
      %p157 = scmp.eq.s32.totalorder %s38, 0
      %p158 = por %p156, %p157
      %p159 = scmp.ne.s32.totalorder %s147, %s148
      %p160 = scmp.eq.s32.totalorder %s39, 1
      %p161 = por %p159, %p160
      %p163 = scmp.ne.s32.totalorder %s148, %s162
      %p164 = scmp.eq.s32.totalorder %s39, 0
      %p165 = por %p163, %p164
      %s167 = sadd.s32 %s166, 1
      %p170 = scmp.eq.s32.totalorder %s33, 1
      %p171 = scmp.ne.s32.totalorder %s166, %s168
      %p172 = scmp.eq.s32.totalorder %s33, 0
      %p173 = por %p171, %p172
      %p174 = scmp.ne.s32.totalorder %s166, %s168
      %p175 = scmp.eq.s32.totalorder %s38, 1
      %p176 = por %p174, %p175
      %p177 = scmp.ne.s32.totalorder %s168, %s169
      %p178 = scmp.eq.s32.totalorder %s38, 0
      %p179 = por %p177, %p178
      %p180 = scmp.ne.s32.totalorder %s168, %s169
      %p181 = scmp.eq.s32.totalorder %s39, 1
      %p182 = por %p180, %p181
      %p184 = scmp.ne.s32.totalorder %s169, %s183
      %p185 = scmp.eq.s32.totalorder %s39, 0
      %p186 = por %p184, %p185
      %s188 = sadd.s32 %s187, 1
      %p191 = scmp.eq.s32.totalorder %s33, 1
      %p192 = scmp.ne.s32.totalorder %s187, %s189
      %p193 = scmp.eq.s32.totalorder %s33, 0
      %p194 = por %p192, %p193
      %p195 = scmp.ne.s32.totalorder %s187, %s189
      %p196 = scmp.eq.s32.totalorder %s38, 1
      %p197 = por %p195, %p196
      %p198 = scmp.ne.s32.totalorder %s189, %s190
      %p199 = scmp.eq.s32.totalorder %s38, 0
      %p200 = por %p198, %p199
      %p201 = scmp.ne.s32.totalorder %s189, %s190
      %p202 = scmp.eq.s32.totalorder %s39, 1
      %p203 = por %p201, %p202
      %p205 = scmp.ne.s32.totalorder %s190, %s204
      %p206 = scmp.eq.s32.totalorder %s39, 0
      %p207 = por %p205, %p206
      %s209 = sadd.s32 %s208, 1
      %p212 = scmp.eq.s32.totalorder %s33, 1
      %p213 = scmp.ne.s32.totalorder %s208, %s210
      %p214 = scmp.eq.s32.totalorder %s33, 0
      %p215 = por %p213, %p214
      %p216 = scmp.ne.s32.totalorder %s208, %s210
      %p217 = scmp.eq.s32.totalorder %s38, 1
      %p218 = por %p216, %p217
      %p219 = scmp.ne.s32.totalorder %s210, %s211
      %p220 = scmp.eq.s32.totalorder %s38, 0
      %p221 = por %p219, %p220
      %p222 = scmp.ne.s32.totalorder %s210, %s211
      %p223 = scmp.eq.s32.totalorder %s39, 1
      %p224 = por %p222, %p223
      %p226 = scmp.ne.s32.totalorder %s211, %s225
      %p227 = scmp.eq.s32.totalorder %s39, 0
      %p228 = por %p226, %p227
      %s230 = sadd.s32 %s229, 1
      %p233 = scmp.eq.s32.totalorder %s33, 1
      %p234 = scmp.ne.s32.totalorder %s229, %s231
      %p235 = scmp.eq.s32.totalorder %s33, 0
      %p236 = por %p234, %p235
      %p237 = scmp.ne.s32.totalorder %s229, %s231
      %p238 = scmp.eq.s32.totalorder %s38, 1
      %p239 = por %p237, %p238
      %p240 = scmp.ne.s32.totalorder %s231, %s232
      %p241 = scmp.eq.s32.totalorder %s38, 0
      %p242 = por %p240, %p241
      %p243 = scmp.ne.s32.totalorder %s231, %s232
      %p244 = scmp.eq.s32.totalorder %s39, 1
      %p245 = por %p243, %p244
      %p247 = scmp.ne.s32.totalorder %s232, %s246
      %p248 = scmp.eq.s32.totalorder %s39, 0
      %p249 = por %p247, %p248
      %s250 = ssub.s32 %s33, %s40
      %p251 = scmp.eq.s32.totalorder %s250, 0
      %s253 = sadd.s32 %s252, 1
      %s254 = scalar_select %p251, %s252, %s253
      %p257 = pneg %p251
      %p258 = scmp.eq.s32.totalorder %s33, 1
      %p259 = por %p257, %p258
      %p260 = scmp.ne.s32.totalorder %s252, %s255
      %p261 = scmp.eq.s32.totalorder %s33, 0
      %p262 = por %p260, %p261
      %p263 = scmp.ne.s32.totalorder %s252, %s255
      %p264 = scmp.eq.s32.totalorder %s38, 1
      %p265 = por %p263, %p264
      %p266 = scmp.ne.s32.totalorder %s255, %s256
      %p267 = scmp.eq.s32.totalorder %s38, 0
      %p268 = por %p266, %p267
      %p269 = scmp.ne.s32.totalorder %s255, %s256
      %p270 = scmp.eq.s32.totalorder %s39, 1
      %p271 = por %p269, %p270
      %p273 = scmp.ne.s32.totalorder %s256, %s272
      %p274 = scmp.eq.s32.totalorder %s39, 0
      %p275 = por %p273, %p274
      %s276 = ssub.s32 %s33, %s40
      %p277 = scmp.eq.s32.totalorder %s276, 0
      %s279 = sadd.s32 %s278, 1
      %s280 = scalar_select %p277, %s278, %s279
      %p283 = pneg %p277
      %p284 = scmp.eq.s32.totalorder %s33, 1
      %p285 = por %p283, %p284
      %p286 = scmp.ne.s32.totalorder %s278, %s281
      %p287 = scmp.eq.s32.totalorder %s33, 0
      %p288 = por %p286, %p287
      %p289 = scmp.ne.s32.totalorder %s278, %s281
      %p290 = scmp.eq.s32.totalorder %s38, 1
      %p291 = por %p289, %p290
      %p292 = scmp.ne.s32.totalorder %s281, %s282
      %p293 = scmp.eq.s32.totalorder %s38, 0
      %p294 = por %p292, %p293
      %p295 = scmp.ne.s32.totalorder %s281, %s282
      %p296 = scmp.eq.s32.totalorder %s39, 1
      %p297 = por %p295, %p296
      %p299 = scmp.ne.s32.totalorder %s282, %s298
      %p300 = scmp.eq.s32.totalorder %s39, 0
      %p301 = por %p299, %p300
      %p302 = scmp.le.s32.totalorder 1, %s33
      %p303 = scmp.lt.s32.totalorder %s33, 3
      %p304 = pnand %p302, %p303
      %p305 = pneg %p304
      // Predicated region
      $region9: #{tlstm_cell.1} parent=5 // pred_check
        _
      $region10: #{tlstm_cell.1} parent=5 // pred_check_branch
        %307 = sbr.rel (%p304) target = $region12
      $region11: #{tlstm_cell.1} parent=5 // pred_region
        %s308 = ssub.s32 %s33, 1
        // Predicated region
        $region13: #{tlstm_cell.1} parent=11 // pred_check
          %p309 = pneg %p158
        $region14: #{tlstm_cell.1} parent=11 // pred_check_branch
          %311 = sbr.rel (%p309) target = $region16
        $region15: #{tlstm_cell.1} parent=11 // pred_region
          %s313 = ssub.s32 4096, 4096
          %314 = vsyncadd [#allocation9], %s313
          %s315 = sshll.u32 [#allocation10], 4
          %s316 = int_to_ptr.vmem [resolvable:$true] %s315
          %321 = dma.hbm_to_vmem [thread:$0]  %s4, 4096, %s316, [#allocation9], 256, 256, 16
        $region16: #{tlstm_cell.1} parent=11 // pred_fallthru
          _
        // Predicated region
        $region17: #{tlstm_cell.1} parent=11 // pred_check
          %p322 = pneg %p179
        $region18: #{tlstm_cell.1} parent=11 // pred_check_branch
          %324 = sbr.rel (%p322) target = $region20
        $region19: #{tlstm_cell.1} parent=11 // pred_region
          %s326 = ssub.s32 4096, 4096
          %327 = vsyncadd [#allocation12], %s326
          %s328 = sshll.u32 [#allocation11], 4
          %s329 = int_to_ptr.vmem [resolvable:$true] %s328
          %334 = dma.hbm_to_vmem [thread:$0]  %s5, 4096, %s329, [#allocation12], 256, 256, 16
        $region20: #{tlstm_cell.1} parent=11 // pred_fallthru
          _
        // Predicated region
        $region21: #{tlstm_cell.1} parent=11 // pred_check
          %p335 = pneg %p200
        $region22: #{tlstm_cell.1} parent=11 // pred_check_branch
          %337 = sbr.rel (%p335) target = $region24
        $region23: #{tlstm_cell.1} parent=11 // pred_region
          _
        $region24: #{tlstm_cell.1} parent=11 // pred_fallthru
          _
        // Predicated region
        $region25: #{tlstm_cell.1} parent=11 // pred_check
          %p338 = pneg %p221
        $region26: #{tlstm_cell.1} parent=11 // pred_check_branch
          %340 = sbr.rel (%p338) target = $region28
        $region27: #{tlstm_cell.1} parent=11 // pred_region
          %s342 = ssub.s32 1024, 1024
          %343 = vsyncadd [#allocation12], %s342
          %s344 = sshll.u32 [#allocation13], 4
          %s345 = int_to_ptr.vmem [resolvable:$true] %s344
          %350 = dma.hbm_to_vmem [thread:$0]  %s7, 1024, %s345, [#allocation12], 64, 64, 4
        $region28: #{tlstm_cell.1} parent=11 // pred_fallthru
          _
        // Predicated region
        $region29: #{tlstm_cell.1} parent=11 // pred_check
          %p351 = pneg %p242
        $region30: #{tlstm_cell.1} parent=11 // pred_check_branch
          %353 = sbr.rel (%p351) target = $region32
        $region31: #{tlstm_cell.1} parent=11 // pred_region
          _
        $region32: #{tlstm_cell.1} parent=11 // pred_fallthru
          _
      $region12: #{tlstm_cell.1} parent=5 // pred_fallthru
        _
      %p354 = scmp.lt.s32.totalorder %s33, 2
      // Predicated region
      $region33: #{tlstm_cell.1} parent=5 // pred_check
        %p355 = pneg %p354
      $region34: #{tlstm_cell.1} parent=5 // pred_check_branch
        %357 = sbr.rel (%p355) target = $region36
      $region35: #{tlstm_cell.1} parent=5 // pred_region
        // Predicated region
        $region37: #{tlstm_cell.1} parent=35 // pred_check
          %p358 = pneg %p53
        $region38: #{tlstm_cell.1} parent=35 // pred_check_branch
          %360 = sbr.rel (%p358) target = $region40
        $region39: #{tlstm_cell.1} parent=35 // pred_region
          %s361 = sand.u32 %s43, 1
          %s362 = scalar_lea.sflag [#allocation3], %s361
          %s363 = sand.u32 %s43, 1
          %s364 = smul.addr %s363, 8
          %s365 = scalar_lea.vmem [#allocation2], %s364
          %s367 = ssub.s32 128, 128
          %368 = vsyncadd %s362, %s367
          %s369 = smul.addr %s33, 128
          %s370 = scalar_lea.hbm %s0, %s369
          %s372 = sshll.u32 %s365, 4
          %s373 = int_to_ptr.vmem [resolvable:$true] %s372
          %375 = dma.hbm_to_vmem [thread:$0]  %s370, 128, %s373, %s362
        $region40: #{tlstm_cell.1} parent=35 // pred_fallthru
          _
        // Predicated region
        $region41: #{tlstm_cell.1} parent=35 // pred_check
          %p376 = pneg %p79
        $region42: #{tlstm_cell.1} parent=35 // pred_check_branch
          %378 = sbr.rel (%p376) target = $region44
        $region43: #{tlstm_cell.1} parent=35 // pred_region
          %s379 = sand.u32 %s33, 1
          %s380 = scalar_lea.sflag [#allocation6], %s379
          %s381 = sand.u32 %s69, 1
          %s382 = smul.addr %s381, 8
          %s383 = scalar_lea.vmem [#allocation5], %s382
          %s385 = ssub.s32 128, 128
          %386 = vsyncadd %s380, %s385
          %s387 = smul.addr %s33, 128
          %s388 = scalar_lea.hbm %s1, %s387
          %s390 = sshll.u32 %s383, 4
          %s391 = int_to_ptr.vmem [resolvable:$true] %s390
          %393 = dma.hbm_to_vmem [thread:$0]  %s388, 128, %s391, %s380
        $region44: #{tlstm_cell.1} parent=35 // pred_fallthru
          _
        // Predicated region
        $region45: #{tlstm_cell.1} parent=35 // pred_check
          %p394 = pneg %p105
        $region46: #{tlstm_cell.1} parent=35 // pred_check_branch
          %396 = sbr.rel (%p394) target = $region48
        $region47: #{tlstm_cell.1} parent=35 // pred_region
          %s397 = sand.u32 %s33, 1
          %s398 = scalar_lea.sflag [#allocation6], %s397
          %s399 = sand.u32 %s95, 1
          %s400 = smul.addr %s399, 8
          %s401 = scalar_lea.vmem [#allocation7], %s400
          %s403 = ssub.s32 128, 128
          %404 = vsyncadd %s398, %s403
          %s405 = smul.addr %s33, 128
          %s406 = scalar_lea.hbm %s2, %s405
          %s408 = sshll.u32 %s401, 4
          %s409 = int_to_ptr.vmem [resolvable:$true] %s408
          %411 = dma.hbm_to_vmem [thread:$0]  %s406, 128, %s409, %s398
        $region48: #{tlstm_cell.1} parent=35 // pred_fallthru
          _
        // Predicated region
        $region49: #{tlstm_cell.1} parent=35 // pred_check
          %p412 = pneg %p131
        $region50: #{tlstm_cell.1} parent=35 // pred_check_branch
          %414 = sbr.rel (%p412) target = $region52
        $region51: #{tlstm_cell.1} parent=35 // pred_region
          %s415 = sand.u32 %s33, 1
          %s416 = scalar_lea.sflag [#allocation9], %s415
          %s417 = sand.u32 %s121, 1
          %s418 = smul.addr %s417, 8
          %s419 = scalar_lea.vmem [#allocation8], %s418
          %s421 = ssub.s32 128, 128
          %422 = vsyncadd %s416, %s421
          %s423 = smul.addr %s33, 128
          %s424 = scalar_lea.hbm %s3, %s423
          %s426 = sshll.u32 %s419, 4
          %s427 = int_to_ptr.vmem [resolvable:$true] %s426
          %429 = dma.hbm_to_vmem [thread:$0]  %s424, 128, %s427, %s416
        $region52: #{tlstm_cell.1} parent=35 // pred_fallthru
          _
      $region36: #{tlstm_cell.1} parent=5 // pred_fallthru
        _
      %p430 = scmp.le.s32.totalorder 1, %s33
      %p431 = scmp.lt.s32.totalorder %s33, 3
      %p432 = pnand %p430, %p431
      %p433 = pneg %p432
      // Predicated region
      $region53: #{tlstm_cell.1} parent=5 // pred_check
        _
      $region54: #{tlstm_cell.1} parent=5 // pred_check_branch
        %435 = sbr.rel (%p432) target = $region56
      $region55: #{tlstm_cell.1} parent=5 // pred_region
        %s436 = ssub.s32 %s33, 1
        %s437 = sand.u32 %s46, 1
        %s438 = scalar_lea.sflag [#allocation3], %s437
        %s439 = sand.u32 %s46, 1
        %s440 = smul.addr %s439, 8
        %s441 = scalar_lea.vmem [#allocation2], %s440
        // Predicated region
        $region57: #{tlstm_cell.1} parent=55 // pred_check
          %p442 = pneg %p59
        $region58: #{tlstm_cell.1} parent=55 // pred_check_branch
          %444 = sbr.rel (%p442) target = $region60
        $region59: #{tlstm_cell.1} parent=55 // pred_region
          %445 = dma.done %s438, 128
        $region60: #{tlstm_cell.1} parent=55 // pred_fallthru
          _
        %s446 = sand.u32 %s38, 1
        %s447 = scalar_lea.sflag [#allocation6], %s446
        %s448 = sand.u32 %s72, 1
        %s449 = smul.addr %s448, 8
        %s450 = scalar_lea.vmem [#allocation5], %s449
        // Predicated region
        $region61: #{tlstm_cell.1} parent=55 // pred_check
          %p451 = pneg %p85
        $region62: #{tlstm_cell.1} parent=55 // pred_check_branch
          %453 = sbr.rel (%p451) target = $region64
        $region63: #{tlstm_cell.1} parent=55 // pred_region
          %454 = dma.done %s447, 128
        $region64: #{tlstm_cell.1} parent=55 // pred_fallthru
          _
        %s455 = sand.u32 %s38, 1
        %s456 = scalar_lea.sflag [#allocation6], %s455
        %s457 = sand.u32 %s98, 1
        %s458 = smul.addr %s457, 8
        %s459 = scalar_lea.vmem [#allocation7], %s458
        // Predicated region
        $region65: #{tlstm_cell.1} parent=55 // pred_check
          %p460 = pneg %p111
        $region66: #{tlstm_cell.1} parent=55 // pred_check_branch
          %462 = sbr.rel (%p460) target = $region68
        $region67: #{tlstm_cell.1} parent=55 // pred_region
          %463 = dma.done %s456, 128
        $region68: #{tlstm_cell.1} parent=55 // pred_fallthru
          _
        %s464 = sand.u32 %s38, 1
        %s465 = scalar_lea.sflag [#allocation9], %s464
        %s466 = sand.u32 %s124, 1
        %s467 = smul.addr %s466, 8
        %s468 = scalar_lea.vmem [#allocation8], %s467
        // Predicated region
        $region69: #{tlstm_cell.1} parent=55 // pred_check
          %p469 = pneg %p137
        $region70: #{tlstm_cell.1} parent=55 // pred_check_branch
          %471 = sbr.rel (%p469) target = $region72
        $region71: #{tlstm_cell.1} parent=55 // pred_region
          %472 = dma.done %s465, 128
        $region72: #{tlstm_cell.1} parent=55 // pred_fallthru
          _
        // Predicated region
        $region73: #{tlstm_cell.1} parent=55 // pred_check
          %p473 = pneg %p158
        $region74: #{tlstm_cell.1} parent=55 // pred_check_branch
          %475 = sbr.rel (%p473) target = $region76
        $region75: #{tlstm_cell.1} parent=55 // pred_region
          %476 = dma.done [#allocation9], 4096
        $region76: #{tlstm_cell.1} parent=55 // pred_fallthru
          _
        // Predicated region
        $region77: #{tlstm_cell.1} parent=55 // pred_check
          %p477 = pneg %p179
        $region78: #{tlstm_cell.1} parent=55 // pred_check_branch
          %479 = sbr.rel (%p477) target = $region80
        $region79: #{tlstm_cell.1} parent=55 // pred_region
          %480 = dma.done [#allocation12], 4096
        $region80: #{tlstm_cell.1} parent=55 // pred_fallthru
          _
        // Predicated region
        $region81: #{tlstm_cell.1} parent=55 // pred_check
          %p481 = pneg %p221
        $region82: #{tlstm_cell.1} parent=55 // pred_check_branch
          %483 = sbr.rel (%p481) target = $region84
        $region83: #{tlstm_cell.1} parent=55 // pred_region
          %484 = dma.done [#allocation12], 1024
        $region84: #{tlstm_cell.1} parent=55 // pred_fallthru
          _
        %s485 = sand.u32 %s46, 1
        %s486 = scalar_lea.sflag [#allocation3], %s485
        %s487 = sand.u32 %s46, 1
        %s488 = smul.addr %s487, 8
        %s489 = scalar_lea.vmem [#allocation2], %s488
        %p490 = pneg %p59
        %p491 = pneg %p56
        %s492 = sand.u32 %s38, 1
        %s493 = scalar_lea.sflag [#allocation6], %s492
        %s494 = sand.u32 %s72, 1
        %s495 = smul.addr %s494, 8
        %s496 = scalar_lea.vmem [#allocation5], %s495
        %p497 = pneg %p85
        %p498 = pneg %p82
        %s499 = sand.u32 %s38, 1
        %s500 = scalar_lea.sflag [#allocation6], %s499
        %s501 = sand.u32 %s98, 1
        %s502 = smul.addr %s501, 8
        %s503 = scalar_lea.vmem [#allocation7], %s502
        %p504 = pneg %p111
        %p505 = pneg %p108
        %s506 = sand.u32 %s38, 1
        %s507 = scalar_lea.sflag [#allocation9], %s506
        %s508 = sand.u32 %s124, 1
        %s509 = smul.addr %s508, 8
        %s510 = scalar_lea.vmem [#allocation8], %s509
        %p511 = pneg %p137
        %p512 = pneg %p134
        %p513 = pneg %p158
        %p514 = pneg %p155
        %p515 = pneg %p179
        %p516 = pneg %p176
        %p517 = pneg %p200
        %p518 = pneg %p197
        %p519 = pneg %p221
        %p520 = pneg %p218
        %p521 = pneg %p242
        %p522 = pneg %p239
        %p523 = pneg %p268
        %p524 = pneg %p265
        %s525 = sand.u32 %s255, 1
        %s526 = scalar_lea.sflag [#allocation4], %s525
        %s527 = sand.u32 %s255, 1
        %s528 = smul.addr %s527, 8
        %s529 = scalar_lea.vmem [#allocation14], %s528
        %p530 = pneg %p294
        %p531 = pneg %p291
        %s532 = sand.u32 %s281, 1
        %s533 = scalar_lea.sflag [#allocation16], %s532
        %s534 = sand.u32 %s281, 1
        %s535 = smul.addr %s534, 8
        %s536 = scalar_lea.vmem [#allocation15], %s535
        %v538 = vld [vmem:[%s468] sm:$0xff]
        %v539 = vld [vmem:[%s459] sm:$0xff]
        %v540 = vpack.c.bf16 %v538, %v538
        %v541 = vld [vmem:[#allocation13] sm:$0xf]
        %v542 = vld [vmem:[#allocation13 + $0x4] sm:$0xf]
        %v543 = vld [vmem:[#allocation13 + $0x8] sm:$0xf]
        %v544 = vld [vmem:[#allocation13 + $0xc] sm:$0xf]
        %v545 = vld [vmem:[#allocation13 + $0x10] sm:$0xf]
        %v546 = vld [vmem:[#allocation13 + $0x14] sm:$0xf]
        %v547 = vld [vmem:[#allocation13 + $0x18] sm:$0xf]
        %v548 = vld [vmem:[#allocation13 + $0x1c] sm:$0xf]
        %v549 = vld [vmem:[#allocation13 + $0x20] sm:$0xf]
        %v550 = vld [vmem:[#allocation13 + $0x24] sm:$0xf]
        %v551 = vld [vmem:[#allocation13 + $0x28] sm:$0xf]
        %v552 = vld [vmem:[#allocation13 + $0x2c] sm:$0xf]
        %v553 = vld [vmem:[#allocation13 + $0x30] sm:$0xf]
        %v554 = vld [vmem:[#allocation13 + $0x34] sm:$0xf]
        %v555 = vld [vmem:[#allocation13 + $0x38] sm:$0xf]
        %v556 = vld [vmem:[#allocation13 + $0x3c] sm:$0xf]
        %v557 = vld [vmem:[%s8] sm:$0x1]
        %v559 = vlaneseq
        %v560 = vshrl.u32 %v559, 7
        %v561 = vsub.s32 0, %v560
        %v562 = vrot.slane %v557, %v561
        %v580 = vunpack.c.l.b16 %v541
        %v581 = vunpack.c.l.b16 %v542
        %v582 = vunpack.c.l.b16 %v543
        %v583 = vunpack.c.l.b16 %v544
        %v584 = vunpack.c.l.b16 %v545
        %v585 = vunpack.c.l.b16 %v546
        %v586 = vunpack.c.l.b16 %v547
        %v587 = vunpack.c.l.b16 %v548
        %v588 = vunpack.c.l.b16 %v549
        %v589 = vunpack.c.l.b16 %v550
        %v590 = vunpack.c.l.b16 %v551
        %v591 = vunpack.c.l.b16 %v552
        %v592 = vunpack.c.l.b16 %v553
        %v593 = vunpack.c.l.b16 %v554
        %v594 = vunpack.c.l.b16 %v555
        %v595 = vunpack.c.l.b16 %v556
        %v596 = vpack.c.b16 %v581, %v580
        %v597 = vpack.c.b16 %v583, %v582
        %v598 = vpack.c.b16 %v585, %v584
        %v599 = vpack.c.b16 %v587, %v586
        %v600 = vpack.c.b16 %v589, %v588
        %v601 = vpack.c.b16 %v591, %v590
        %v602 = vpack.c.b16 %v593, %v592
        %v603 = vpack.c.b16 %v595, %v594
        %612 = vmatprep.subr.bf16.mxu0 0
        %613 = vmatpush1.bf16.msra.mxu0 %v596
        %614 = vmatprep.subr.bf16.mxu0 0
        %615 = vmatpush1.bf16.msra.mxu0 %v597
        %616 = vmatprep.subr.bf16.mxu0 0
        %617 = vmatpush1.bf16.msra.mxu0 %v598
        %618 = vmatprep.subr.bf16.mxu0 0
        %619 = vmatpush1.bf16.msra.mxu0 %v599
        %620 = vmatprep.subr.bf16.mxu0 0
        %621 = vmatpush1.bf16.msra.mxu0 %v600
        %622 = vmatprep.subr.bf16.mxu0 0
        %623 = vmatpush1.bf16.msra.mxu0 %v601
        %624 = vmatprep.subr.bf16.mxu0 0
        %625 = vmatpush1.bf16.msra.mxu0 %v602
        %626 = vmatprep.subr.bf16.mxu0 0
        %627 = vmatpush1.bf16.msra.mxu0 %v603
        %628 = vmatprep.subr.bf16.mxu0 0
        %629 = vmatpush1.bf16.msra.mxu0 0
        %630 = vmatprep.subr.bf16.mxu0 0
        %631 = vmatpush1.bf16.msra.mxu0 0
        %632 = vmatprep.subr.bf16.mxu0 0
        %633 = vmatpush1.bf16.msra.mxu0 0
        %634 = vmatprep.subr.bf16.mxu0 0
        %635 = vmatpush1.bf16.msra.mxu0 0
        %636 = vmatprep.subr.bf16.mxu0 0
        %637 = vmatpush1.bf16.msra.mxu0 0
        %638 = vmatprep.subr.bf16.mxu0 0
        %639 = vmatpush1.bf16.msra.mxu0 0
        %640 = vmatprep.subr.bf16.mxu0 0
        %641 = vmatpush1.bf16.msra.mxu0 0
        %642 = vmatprep.subr.bf16.mxu0 0
        %643 = vmatpush1.bf16.msra.mxu0 0
        %644 = vmatprep.mubr.bf16.mxu0 0
        %645 = vmatmul.mubr.bf16.gmra.mrb[0].mxu0 %v540
        %v646 = vpop.f32.mrb[0].mxu0
        %v647 = vadd.f32 %v562, %v646
        %v648 = vpop.f32.mrb[0].mxu0
        %v649 = vpop.f32.mrb[0].mxu0
        %v650 = vpop.f32.mrb[0].mxu0
        %651 = vdwg.mxu0
        %v652 = vtanh.pop %v647
        %v653 = vsub.f32 %v539, 1.0
        %v654 = vmul.f32 %v652, %v653
        %v655 = vadd.f32 %v538, %v654
        %v656 = vld [vmem:[%s441] sm:$0xff]
        %v657 = vpack.c.bf16 %v656, %v656
        %v658 = vld [vmem:[#allocation10] sm:$0xff]
        %v659 = vld [vmem:[#allocation10 + $0x8] sm:$0xff]
        %v660 = vld [vmem:[#allocation10 + $0x10] sm:$0xff]
        %v661 = vld [vmem:[#allocation10 + $0x18] sm:$0xff]
        %v662 = vld [vmem:[#allocation10 + $0x20] sm:$0xff]
        %v663 = vld [vmem:[#allocation10 + $0x28] sm:$0xff]
        %v664 = vld [vmem:[#allocation10 + $0x30] sm:$0xff]
        %v665 = vld [vmem:[#allocation10 + $0x38] sm:$0xff]
        %v666 = vld [vmem:[#allocation10 + $0x40] sm:$0xff]
        %v667 = vld [vmem:[#allocation10 + $0x48] sm:$0xff]
        %v668 = vld [vmem:[#allocation10 + $0x50] sm:$0xff]
        %v669 = vld [vmem:[#allocation10 + $0x58] sm:$0xff]
        %v670 = vld [vmem:[#allocation10 + $0x60] sm:$0xff]
        %v671 = vld [vmem:[#allocation10 + $0x68] sm:$0xff]
        %v672 = vld [vmem:[#allocation10 + $0x70] sm:$0xff]
        %v673 = vld [vmem:[#allocation10 + $0x78] sm:$0xff]
        %v674 = vld [vmem:[#allocation10 + $0x80] sm:$0xff]
        %v675 = vld [vmem:[#allocation10 + $0x88] sm:$0xff]
        %v676 = vld [vmem:[#allocation10 + $0x90] sm:$0xff]
        %v677 = vld [vmem:[#allocation10 + $0x98] sm:$0xff]
        %v678 = vld [vmem:[#allocation10 + $0xa0] sm:$0xff]
        %v679 = vld [vmem:[#allocation10 + $0xa8] sm:$0xff]
        %v680 = vld [vmem:[#allocation10 + $0xb0] sm:$0xff]
        %v681 = vld [vmem:[#allocation10 + $0xb8] sm:$0xff]
        %v682 = vld [vmem:[#allocation10 + $0xc0] sm:$0xff]
        %v683 = vld [vmem:[#allocation10 + $0xc8] sm:$0xff]
        %v684 = vld [vmem:[#allocation10 + $0xd0] sm:$0xff]
        %v685 = vld [vmem:[#allocation10 + $0xd8] sm:$0xff]
        %v686 = vld [vmem:[#allocation10 + $0xe0] sm:$0xff]
        %v687 = vld [vmem:[#allocation10 + $0xe8] sm:$0xff]
        %v688 = vld [vmem:[#allocation10 + $0xf0] sm:$0xff]
        %v689 = vld [vmem:[#allocation10 + $0xf8] sm:$0xff]
        %v690 = vld [vmem:[%s450] sm:$0xff]
        %v691 = vpack.c.bf16 %v690, %v690
        %v692 = vld [vmem:[#allocation11] sm:$0xff]
        %v693 = vld [vmem:[#allocation11 + $0x8] sm:$0xff]
        %v694 = vld [vmem:[#allocation11 + $0x10] sm:$0xff]
        %v695 = vld [vmem:[#allocation11 + $0x18] sm:$0xff]
        %v696 = vld [vmem:[#allocation11 + $0x20] sm:$0xff]
        %v697 = vld [vmem:[#allocation11 + $0x28] sm:$0xff]
        %v698 = vld [vmem:[#allocation11 + $0x30] sm:$0xff]
        %v699 = vld [vmem:[#allocation11 + $0x38] sm:$0xff]
        %v700 = vld [vmem:[#allocation11 + $0x40] sm:$0xff]
        %v701 = vld [vmem:[#allocation11 + $0x48] sm:$0xff]
        %v702 = vld [vmem:[#allocation11 + $0x50] sm:$0xff]
        %v703 = vld [vmem:[#allocation11 + $0x58] sm:$0xff]
        %v704 = vld [vmem:[#allocation11 + $0x60] sm:$0xff]
        %v705 = vld [vmem:[#allocation11 + $0x68] sm:$0xff]
        %v706 = vld [vmem:[#allocation11 + $0x70] sm:$0xff]
        %v707 = vld [vmem:[#allocation11 + $0x78] sm:$0xff]
        %v708 = vld [vmem:[#allocation11 + $0x80] sm:$0xff]
        %v709 = vld [vmem:[#allocation11 + $0x88] sm:$0xff]
        %v710 = vld [vmem:[#allocation11 + $0x90] sm:$0xff]
        %v711 = vld [vmem:[#allocation11 + $0x98] sm:$0xff]
        %v712 = vld [vmem:[#allocation11 + $0xa0] sm:$0xff]
        %v713 = vld [vmem:[#allocation11 + $0xa8] sm:$0xff]
        %v714 = vld [vmem:[#allocation11 + $0xb0] sm:$0xff]
        %v715 = vld [vmem:[#allocation11 + $0xb8] sm:$0xff]
        %v716 = vld [vmem:[#allocation11 + $0xc0] sm:$0xff]
        %v717 = vld [vmem:[#allocation11 + $0xc8] sm:$0xff]
        %v718 = vld [vmem:[#allocation11 + $0xd0] sm:$0xff]
        %v719 = vld [vmem:[#allocation11 + $0xd8] sm:$0xff]
        %v720 = vld [vmem:[#allocation11 + $0xe0] sm:$0xff]
        %v721 = vld [vmem:[#allocation11 + $0xe8] sm:$0xff]
        %v722 = vld [vmem:[#allocation11 + $0xf0] sm:$0xff]
        %v723 = vld [vmem:[#allocation11 + $0xf8] sm:$0xff]
        %v756 = vunpack.c.l.b16 %v692
        %v757 = vunpack.c.h.b16 %v692
        %v758 = vunpack.c.l.b16 %v693
        %v759 = vunpack.c.h.b16 %v693
        %v760 = vunpack.c.l.b16 %v694
        %v761 = vunpack.c.h.b16 %v694
        %v762 = vunpack.c.l.b16 %v695
        %v763 = vunpack.c.h.b16 %v695
        %v764 = vunpack.c.l.b16 %v696
        %v765 = vunpack.c.h.b16 %v696
        %v766 = vunpack.c.l.b16 %v697
        %v767 = vunpack.c.h.b16 %v697
        %v768 = vunpack.c.l.b16 %v698
        %v769 = vunpack.c.h.b16 %v698
        %v770 = vunpack.c.l.b16 %v699
        %v771 = vunpack.c.h.b16 %v699
        %v772 = vunpack.c.l.b16 %v700
        %v773 = vunpack.c.h.b16 %v700
        %v774 = vunpack.c.l.b16 %v701
        %v775 = vunpack.c.h.b16 %v701
        %v776 = vunpack.c.l.b16 %v702
        %v777 = vunpack.c.h.b16 %v702
        %v778 = vunpack.c.l.b16 %v703
        %v779 = vunpack.c.h.b16 %v703
        %v780 = vunpack.c.l.b16 %v704
        %v781 = vunpack.c.h.b16 %v704
        %v782 = vunpack.c.l.b16 %v705
        %v783 = vunpack.c.h.b16 %v705
        %v784 = vunpack.c.l.b16 %v706
        %v785 = vunpack.c.h.b16 %v706
        %v786 = vunpack.c.l.b16 %v707
        %v787 = vunpack.c.h.b16 %v707
        %v788 = vunpack.c.l.b16 %v708
        %v789 = vunpack.c.h.b16 %v708
        %v790 = vunpack.c.l.b16 %v709
        %v791 = vunpack.c.h.b16 %v709
        %v792 = vunpack.c.l.b16 %v710
        %v793 = vunpack.c.h.b16 %v710
        %v794 = vunpack.c.l.b16 %v711
        %v795 = vunpack.c.h.b16 %v711
        %v796 = vunpack.c.l.b16 %v712
        %v797 = vunpack.c.h.b16 %v712
        %v798 = vunpack.c.l.b16 %v713
        %v799 = vunpack.c.h.b16 %v713
        %v800 = vunpack.c.l.b16 %v714
        %v801 = vunpack.c.h.b16 %v714
        %v802 = vunpack.c.l.b16 %v715
        %v803 = vunpack.c.h.b16 %v715
        %v804 = vunpack.c.l.b16 %v716
        %v805 = vunpack.c.h.b16 %v716
        %v806 = vunpack.c.l.b16 %v717
        %v807 = vunpack.c.h.b16 %v717
        %v808 = vunpack.c.l.b16 %v718
        %v809 = vunpack.c.h.b16 %v718
        %v810 = vunpack.c.l.b16 %v719
        %v811 = vunpack.c.h.b16 %v719
        %v812 = vunpack.c.l.b16 %v720
        %v813 = vunpack.c.h.b16 %v720
        %v814 = vunpack.c.l.b16 %v721
        %v815 = vunpack.c.h.b16 %v721
        %v816 = vunpack.c.l.b16 %v722
        %v817 = vunpack.c.h.b16 %v722
        %v818 = vunpack.c.l.b16 %v723
        %v819 = vunpack.c.h.b16 %v723
        %v820 = vpack.c.b16 %v760, %v756
        %v821 = vpack.c.b16 %v761, %v757
        %v822 = vpack.c.b16 %v762, %v758
        %v823 = vpack.c.b16 %v763, %v759
        %v824 = vpack.c.b16 %v768, %v764
        %v825 = vpack.c.b16 %v769, %v765
        %v826 = vpack.c.b16 %v770, %v766
        %v827 = vpack.c.b16 %v771, %v767
        %v828 = vpack.c.b16 %v776, %v772
        %v829 = vpack.c.b16 %v777, %v773
        %v830 = vpack.c.b16 %v778, %v774
        %v831 = vpack.c.b16 %v779, %v775
        %v832 = vpack.c.b16 %v784, %v780
        %v833 = vpack.c.b16 %v785, %v781
        %v834 = vpack.c.b16 %v786, %v782
        %v835 = vpack.c.b16 %v787, %v783
        %v836 = vpack.c.b16 %v792, %v788
        %v837 = vpack.c.b16 %v793, %v789
        %v838 = vpack.c.b16 %v794, %v790
        %v839 = vpack.c.b16 %v795, %v791
        %v840 = vpack.c.b16 %v800, %v796
        %v841 = vpack.c.b16 %v801, %v797
        %v842 = vpack.c.b16 %v802, %v798
        %v843 = vpack.c.b16 %v803, %v799
        %v844 = vpack.c.b16 %v808, %v804
        %v845 = vpack.c.b16 %v809, %v805
        %v846 = vpack.c.b16 %v810, %v806
        %v847 = vpack.c.b16 %v811, %v807
        %v848 = vpack.c.b16 %v816, %v812
        %v849 = vpack.c.b16 %v817, %v813
        %v850 = vpack.c.b16 %v818, %v814
        %v851 = vpack.c.b16 %v819, %v815
        %884 = vmatprep.subr.bf16.mxu0 %v821
        %885 = vmatpush1.bf16.msra.mxu0 %v820
        %886 = vmatprep.subr.bf16.mxu0 %v825
        %887 = vmatpush1.bf16.msra.mxu0 %v824
        %888 = vmatprep.subr.bf16.mxu0 %v829
        %889 = vmatpush1.bf16.msra.mxu0 %v828
        %890 = vmatprep.subr.bf16.mxu0 %v833
        %891 = vmatpush1.bf16.msra.mxu0 %v832
        %892 = vmatprep.subr.bf16.mxu0 %v837
        %893 = vmatpush1.bf16.msra.mxu0 %v836
        %894 = vmatprep.subr.bf16.mxu0 %v841
        %895 = vmatpush1.bf16.msra.mxu0 %v840
        %896 = vmatprep.subr.bf16.mxu0 %v845
        %897 = vmatpush1.bf16.msra.mxu0 %v844
        %898 = vmatprep.subr.bf16.mxu0 %v849
        %899 = vmatpush1.bf16.msra.mxu0 %v848
        %900 = vmatprep.subr.bf16.mxu0 0
        %901 = vmatpush1.bf16.msra.mxu0 0
        %902 = vmatprep.subr.bf16.mxu0 0
        %903 = vmatpush1.bf16.msra.mxu0 0
        %904 = vmatprep.subr.bf16.mxu0 0
        %905 = vmatpush1.bf16.msra.mxu0 0
        %906 = vmatprep.subr.bf16.mxu0 0
        %907 = vmatpush1.bf16.msra.mxu0 0
        %908 = vmatprep.subr.bf16.mxu0 0
        %909 = vmatpush1.bf16.msra.mxu0 0
        %910 = vmatprep.subr.bf16.mxu0 0
        %911 = vmatpush1.bf16.msra.mxu0 0
        %912 = vmatprep.subr.bf16.mxu0 0
        %913 = vmatpush1.bf16.msra.mxu0 0
        %914 = vmatprep.subr.bf16.mxu0 0
        %915 = vmatpush1.bf16.msra.mxu0 0
        %916 = vmatprep.mubr.bf16.mxu0 0
        %917 = vmatmul.mubr.bf16.gmra.mrb[0].mxu0 %v691
        %v918 = vpop.f32.mrb[0].mxu0
        %v919 = vadd.f32 0.0, %v918
        %v920 = vpop.f32.mrb[0].mxu0
        %v921 = vadd.f32 0.0, %v920
        %v922 = vpop.f32.mrb[0].mxu0
        %v923 = vpop.f32.mrb[0].mxu0
        %924 = vdwg.mxu0
        %925 = vmatprep.subr.bf16.mxu0 %v823
        %926 = vmatpush1.bf16.msra.mxu0 %v822
        %927 = vmatprep.subr.bf16.mxu0 %v827
        %928 = vmatpush1.bf16.msra.mxu0 %v826
        %929 = vmatprep.subr.bf16.mxu0 %v831
        %930 = vmatpush1.bf16.msra.mxu0 %v830
        %931 = vmatprep.subr.bf16.mxu0 %v835
        %932 = vmatpush1.bf16.msra.mxu0 %v834
        %933 = vmatprep.subr.bf16.mxu0 %v839
        %934 = vmatpush1.bf16.msra.mxu0 %v838
        %935 = vmatprep.subr.bf16.mxu0 %v843
        %936 = vmatpush1.bf16.msra.mxu0 %v842
        %937 = vmatprep.subr.bf16.mxu0 %v847
        %938 = vmatpush1.bf16.msra.mxu0 %v846
        %939 = vmatprep.subr.bf16.mxu0 %v851
        %940 = vmatpush1.bf16.msra.mxu0 %v850
        %941 = vmatprep.subr.bf16.mxu0 0
        %942 = vmatpush1.bf16.msra.mxu0 0
        %943 = vmatprep.subr.bf16.mxu0 0
        %944 = vmatpush1.bf16.msra.mxu0 0
        %945 = vmatprep.subr.bf16.mxu0 0
        %946 = vmatpush1.bf16.msra.mxu0 0
        %947 = vmatprep.subr.bf16.mxu0 0
        %948 = vmatpush1.bf16.msra.mxu0 0
        %949 = vmatprep.subr.bf16.mxu0 0
        %950 = vmatpush1.bf16.msra.mxu0 0
        %951 = vmatprep.subr.bf16.mxu0 0
        %952 = vmatpush1.bf16.msra.mxu0 0
        %953 = vmatprep.subr.bf16.mxu0 0
        %954 = vmatpush1.bf16.msra.mxu0 0
        %955 = vmatprep.subr.bf16.mxu0 0
        %956 = vmatpush1.bf16.msra.mxu0 0
        %957 = vmatprep.mubr.bf16.mxu0 0
        %958 = vmatmul.mubr.bf16.gmra.mrb[0].mxu0 %v691
        %v959 = vpop.f32.mrb[0].mxu0
        %v960 = vadd.f32 0.0, %v959
        %v961 = vpop.f32.mrb[0].mxu0
        %v962 = vadd.f32 0.0, %v961
        %v963 = vpop.f32.mrb[0].mxu0
        %v964 = vpop.f32.mrb[0].mxu0
        %965 = vdwg.mxu0
        %v998 = vunpack.c.l.b16 %v658
        %v999 = vunpack.c.h.b16 %v658
        %v1000 = vunpack.c.l.b16 %v659
        %v1001 = vunpack.c.h.b16 %v659
        %v1002 = vunpack.c.l.b16 %v660
        %v1003 = vunpack.c.h.b16 %v660
        %v1004 = vunpack.c.l.b16 %v661
        %v1005 = vunpack.c.h.b16 %v661
        %v1006 = vunpack.c.l.b16 %v662
        %v1007 = vunpack.c.h.b16 %v662
        %v1008 = vunpack.c.l.b16 %v663
        %v1009 = vunpack.c.h.b16 %v663
        %v1010 = vunpack.c.l.b16 %v664
        %v1011 = vunpack.c.h.b16 %v664
        %v1012 = vunpack.c.l.b16 %v665
        %v1013 = vunpack.c.h.b16 %v665
        %v1014 = vunpack.c.l.b16 %v666
        %v1015 = vunpack.c.h.b16 %v666
        %v1016 = vunpack.c.l.b16 %v667
        %v1017 = vunpack.c.h.b16 %v667
        %v1018 = vunpack.c.l.b16 %v668
        %v1019 = vunpack.c.h.b16 %v668
        %v1020 = vunpack.c.l.b16 %v669
        %v1021 = vunpack.c.h.b16 %v669
        %v1022 = vunpack.c.l.b16 %v670
        %v1023 = vunpack.c.h.b16 %v670
        %v1024 = vunpack.c.l.b16 %v671
        %v1025 = vunpack.c.h.b16 %v671
        %v1026 = vunpack.c.l.b16 %v672
        %v1027 = vunpack.c.h.b16 %v672
        %v1028 = vunpack.c.l.b16 %v673
        %v1029 = vunpack.c.h.b16 %v673
        %v1030 = vunpack.c.l.b16 %v674
        %v1031 = vunpack.c.h.b16 %v674
        %v1032 = vunpack.c.l.b16 %v675
        %v1033 = vunpack.c.h.b16 %v675
        %v1034 = vunpack.c.l.b16 %v676
        %v1035 = vunpack.c.h.b16 %v676
        %v1036 = vunpack.c.l.b16 %v677
        %v1037 = vunpack.c.h.b16 %v677
        %v1038 = vunpack.c.l.b16 %v678
        %v1039 = vunpack.c.h.b16 %v678
        %v1040 = vunpack.c.l.b16 %v679
        %v1041 = vunpack.c.h.b16 %v679
        %v1042 = vunpack.c.l.b16 %v680
        %v1043 = vunpack.c.h.b16 %v680
        %v1044 = vunpack.c.l.b16 %v681
        %v1045 = vunpack.c.h.b16 %v681
        %v1046 = vunpack.c.l.b16 %v682
        %v1047 = vunpack.c.h.b16 %v682
        %v1048 = vunpack.c.l.b16 %v683
        %v1049 = vunpack.c.h.b16 %v683
        %v1050 = vunpack.c.l.b16 %v684
        %v1051 = vunpack.c.h.b16 %v684
        %v1052 = vunpack.c.l.b16 %v685
        %v1053 = vunpack.c.h.b16 %v685
        %v1054 = vunpack.c.l.b16 %v686
        %v1055 = vunpack.c.h.b16 %v686
        %v1056 = vunpack.c.l.b16 %v687
        %v1057 = vunpack.c.h.b16 %v687
        %v1058 = vunpack.c.l.b16 %v688
        %v1059 = vunpack.c.h.b16 %v688
        %v1060 = vunpack.c.l.b16 %v689
        %v1061 = vunpack.c.h.b16 %v689
        %v1062 = vpack.c.b16 %v1002, %v998
        %v1063 = vpack.c.b16 %v1003, %v999
        %v1064 = vpack.c.b16 %v1004, %v1000
        %v1065 = vpack.c.b16 %v1005, %v1001
        %v1066 = vpack.c.b16 %v1010, %v1006
        %v1067 = vpack.c.b16 %v1011, %v1007
        %v1068 = vpack.c.b16 %v1012, %v1008
        %v1069 = vpack.c.b16 %v1013, %v1009
        %v1070 = vpack.c.b16 %v1018, %v1014
        %v1071 = vpack.c.b16 %v1019, %v1015
        %v1072 = vpack.c.b16 %v1020, %v1016
        %v1073 = vpack.c.b16 %v1021, %v1017
        %v1074 = vpack.c.b16 %v1026, %v1022
        %v1075 = vpack.c.b16 %v1027, %v1023
        %v1076 = vpack.c.b16 %v1028, %v1024
        %v1077 = vpack.c.b16 %v1029, %v1025
        %v1078 = vpack.c.b16 %v1034, %v1030
        %v1079 = vpack.c.b16 %v1035, %v1031
        %v1080 = vpack.c.b16 %v1036, %v1032
        %v1081 = vpack.c.b16 %v1037, %v1033
        %v1082 = vpack.c.b16 %v1042, %v1038
        %v1083 = vpack.c.b16 %v1043, %v1039
        %v1084 = vpack.c.b16 %v1044, %v1040
        %v1085 = vpack.c.b16 %v1045, %v1041
        %v1086 = vpack.c.b16 %v1050, %v1046
        %v1087 = vpack.c.b16 %v1051, %v1047
        %v1088 = vpack.c.b16 %v1052, %v1048
        %v1089 = vpack.c.b16 %v1053, %v1049
        %v1090 = vpack.c.b16 %v1058, %v1054
        %v1091 = vpack.c.b16 %v1059, %v1055
        %v1092 = vpack.c.b16 %v1060, %v1056
        %v1093 = vpack.c.b16 %v1061, %v1057
        %1126 = vmatprep.subr.bf16.mxu0 %v1063
        %1127 = vmatpush1.bf16.msra.mxu0 %v1062
        %1128 = vmatprep.subr.bf16.mxu0 %v1067
        %1129 = vmatpush1.bf16.msra.mxu0 %v1066
        %1130 = vmatprep.subr.bf16.mxu0 %v1071
        %1131 = vmatpush1.bf16.msra.mxu0 %v1070
        %1132 = vmatprep.subr.bf16.mxu0 %v1075
        %1133 = vmatpush1.bf16.msra.mxu0 %v1074
        %1134 = vmatprep.subr.bf16.mxu0 %v1079
        %1135 = vmatpush1.bf16.msra.mxu0 %v1078
        %1136 = vmatprep.subr.bf16.mxu0 %v1083
        %1137 = vmatpush1.bf16.msra.mxu0 %v1082
        %1138 = vmatprep.subr.bf16.mxu0 %v1087
        %1139 = vmatpush1.bf16.msra.mxu0 %v1086
        %1140 = vmatprep.subr.bf16.mxu0 %v1091
        %1141 = vmatpush1.bf16.msra.mxu0 %v1090
        %1142 = vmatprep.subr.bf16.mxu0 0
        %1143 = vmatpush1.bf16.msra.mxu0 0
        %1144 = vmatprep.subr.bf16.mxu0 0
        %1145 = vmatpush1.bf16.msra.mxu0 0
        %1146 = vmatprep.subr.bf16.mxu0 0
        %1147 = vmatpush1.bf16.msra.mxu0 0
        %1148 = vmatprep.subr.bf16.mxu0 0
        %1149 = vmatpush1.bf16.msra.mxu0 0
        %1150 = vmatprep.subr.bf16.mxu0 0
        %1151 = vmatpush1.bf16.msra.mxu0 0
        %1152 = vmatprep.subr.bf16.mxu0 0
        %1153 = vmatpush1.bf16.msra.mxu0 0
        %1154 = vmatprep.subr.bf16.mxu0 0
        %1155 = vmatpush1.bf16.msra.mxu0 0
        %1156 = vmatprep.subr.bf16.mxu0 0
        %1157 = vmatpush1.bf16.msra.mxu0 0
        %1158 = vmatprep.mubr.bf16.mxu0 0
        %1159 = vmatmul.mubr.bf16.gmra.mrb[0].mxu0 %v657
        %v1160 = vpop.f32.mrb[0].mxu0
        %v1161 = vadd.f32 %v919, %v1160
        %v1162 = vpop.f32.mrb[0].mxu0
        %v1163 = vadd.f32 %v921, %v1162
        %v1164 = vpop.f32.mrb[0].mxu0
        %v1165 = vpop.f32.mrb[0].mxu0
        %1166 = vdwg.mxu0
        %1167 = vmatprep.subr.bf16.mxu0 %v1065
        %1168 = vmatpush1.bf16.msra.mxu0 %v1064
        %1169 = vmatprep.subr.bf16.mxu0 %v1069
        %1170 = vmatpush1.bf16.msra.mxu0 %v1068
        %1171 = vmatprep.subr.bf16.mxu0 %v1073
        %1172 = vmatpush1.bf16.msra.mxu0 %v1072
        %1173 = vmatprep.subr.bf16.mxu0 %v1077
        %1174 = vmatpush1.bf16.msra.mxu0 %v1076
        %1175 = vmatprep.subr.bf16.mxu0 %v1081
        %1176 = vmatpush1.bf16.msra.mxu0 %v1080
        %1177 = vmatprep.subr.bf16.mxu0 %v1085
        %1178 = vmatpush1.bf16.msra.mxu0 %v1084
        %1179 = vmatprep.subr.bf16.mxu0 %v1089
        %1180 = vmatpush1.bf16.msra.mxu0 %v1088
        %1181 = vmatprep.subr.bf16.mxu0 %v1093
        %1182 = vmatpush1.bf16.msra.mxu0 %v1092
        %1183 = vmatprep.subr.bf16.mxu0 0
        %1184 = vmatpush1.bf16.msra.mxu0 0
        %1185 = vmatprep.subr.bf16.mxu0 0
        %1186 = vmatpush1.bf16.msra.mxu0 0
        %1187 = vmatprep.subr.bf16.mxu0 0
        %1188 = vmatpush1.bf16.msra.mxu0 0
        %1189 = vmatprep.subr.bf16.mxu0 0
        %1190 = vmatpush1.bf16.msra.mxu0 0
        %1191 = vmatprep.subr.bf16.mxu0 0
        %1192 = vmatpush1.bf16.msra.mxu0 0
        %1193 = vmatprep.subr.bf16.mxu0 0
        %1194 = vmatpush1.bf16.msra.mxu0 0
        %1195 = vmatprep.subr.bf16.mxu0 0
        %1196 = vmatpush1.bf16.msra.mxu0 0
        %1197 = vmatprep.subr.bf16.mxu0 0
        %1198 = vmatpush1.bf16.msra.mxu0 0
        %1199 = vmatprep.mubr.bf16.mxu0 0
        %1200 = vmatmul.mubr.bf16.gmra.mrb[0].mxu0 %v657
        %v1201 = vpop.f32.mrb[0].mxu0
        %v1202 = vadd.f32 %v960, %v1201
        %v1203 = vpop.f32.mrb[0].mxu0
        %v1204 = vadd.f32 %v962, %v1203
        %v1205 = vpop.f32.mrb[0].mxu0
        %v1206 = vpop.f32.mrb[0].mxu0
        %1207 = vdwg.mxu0
        %v1208 = vld [vmem:[%s6] sm:$0xf]
        %v1210 = vlaneseq
        %v1211 = vshrl.u32 %v1210, 7
        %v1212 = vsub.s32 0, %v1211
        %v1213 = vrot.slane %v1208, %v1212
        %v1214 = vlaneseq
        %v1215 = vshrl.u32 %v1214, 7
        %v1216 = vsub.s32 1, %v1215
        %v1217 = vrot.slane %v1208, %v1216
        %v1218 = vlaneseq
        %v1219 = vshrl.u32 %v1218, 7
        %v1220 = vsub.s32 2, %v1219
        %v1221 = vrot.slane %v1208, %v1220
        %v1222 = vlaneseq
        %v1223 = vshrl.u32 %v1222, 7
        %v1224 = vsub.s32 3, %v1223
        %v1225 = vrot.slane %v1208, %v1224
        %v1230 = vadd.f32 %v1161, %v1213
        %v1231 = vadd.f32 %v1163, %v1217
        %v1232 = vadd.f32 %v1202, %v1221
        %v1233 = vadd.f32 %v1204, %v1225
        %v1234 = vxor.u32 %v1230, 2147483648
        %v1235 = vmul.f32 %v1234, 1.442695
        %v1236 = vpow.pop %v1235
        %v1237 = vadd.f32 %v1236, 1.0
        %v1238 = vrcp.pop %v1237
        %v1239 = vmul.f32 1.0, %v1238
        %v1240 = vxor.u32 %v1231, 2147483648
        %v1241 = vmul.f32 %v1240, 1.442695
        %v1242 = vpow.pop %v1241
        %v1243 = vadd.f32 %v1242, 1.0
        %v1244 = vrcp.pop %v1243
        %v1245 = vmul.f32 1.0, %v1244
        %v1246 = vtanh.pop %v1232
        %v1247 = vxor.u32 %v1233, 2147483648
        %v1248 = vmul.f32 %v1247, 1.442695
        %v1249 = vpow.pop %v1248
        %v1250 = vadd.f32 %v1249, 1.0
        %v1251 = vrcp.pop %v1250
        %v1252 = vmul.f32 1.0, %v1251
        %v1253 = vmul.f32 %v1245, %v655
        %v1254 = vmul.f32 %v1239, %v1246
        %v1255 = vadd.f32 %v1253, %v1254
        %v1256 = vtanh.pop %v1255
        %v1257 = vmul.f32 %v1252, %v1256
        %1258 = vst [vmem:[%s529] sm:$0xff] %v1257
        %1259 = vst [vmem:[%s536] sm:$0xff] %v1255
        %s1260 = sand.u32 %s255, 1
        %s1261 = scalar_lea.sflag [#allocation4], %s1260
        %s1262 = sand.u32 %s255, 1
        %s1263 = smul.addr %s1262, 8
        %s1264 = scalar_lea.vmem [#allocation14], %s1263
        %s1265 = sand.u32 %s281, 1
        %s1266 = scalar_lea.sflag [#allocation16], %s1265
        %s1267 = sand.u32 %s281, 1
        %s1268 = smul.addr %s1267, 8
        %s1269 = scalar_lea.vmem [#allocation15], %s1268
        // Predicated region
        $region85: #{tlstm_cell.1} parent=55 // pred_check
          %p1270 = pneg %p265
        $region86: #{tlstm_cell.1} parent=55 // pred_check_branch
          %1272 = sbr.rel (%p1270) target = $region88
        $region87: #{tlstm_cell.1} parent=55 // pred_region
          %s1274 = ssub.s32 128, 128
          %1275 = vsyncadd %s1261, %s1274
          %s1276 = smul.addr %s38, 128
          %s1277 = scalar_lea.hbm %s9, %s1276
          %s1279 = sshll.u32 %s1264, 4
          %s1280 = int_to_ptr.vmem [resolvable:$true] %s1279
          %1282 = dma.vmem_to_hbm [thread:$0]  %s1280, 128, %s1277, %s1261
        $region88: #{tlstm_cell.1} parent=55 // pred_fallthru
          _
        // Predicated region
        $region89: #{tlstm_cell.1} parent=55 // pred_check
          %p1283 = pneg %p291
        $region90: #{tlstm_cell.1} parent=55 // pred_check_branch
          %1285 = sbr.rel (%p1283) target = $region92
        $region91: #{tlstm_cell.1} parent=55 // pred_region
          %s1287 = ssub.s32 128, 128
          %1288 = vsyncadd %s1266, %s1287
          %s1289 = smul.addr %s38, 128
          %s1290 = scalar_lea.hbm %s10, %s1289
          %s1292 = sshll.u32 %s1269, 4
          %s1293 = int_to_ptr.vmem [resolvable:$true] %s1292
          %1295 = dma.vmem_to_hbm [thread:$0]  %s1293, 128, %s1290, %s1266
        $region92: #{tlstm_cell.1} parent=55 // pred_fallthru
          _
      $region56: #{tlstm_cell.1} parent=5 // pred_fallthru
        _
      %p1296 = scmp.le.s32.totalorder 2, %s33
      // Predicated region
      $region93: #{tlstm_cell.1} parent=5 // pred_check
        %p1297 = pneg %p1296
      $region94: #{tlstm_cell.1} parent=5 // pred_check_branch
        %1299 = sbr.rel (%p1297) target = $region96
      $region95: #{tlstm_cell.1} parent=5 // pred_region
        %s1300 = ssub.s32 %s33, 2
        // Predicated region
        $region97: #{tlstm_cell.1} parent=95 // pred_check
          %p1301 = pneg %p271
        $region98: #{tlstm_cell.1} parent=95 // pred_check_branch
          %1303 = sbr.rel (%p1301) target = $region100
        $region99: #{tlstm_cell.1} parent=95 // pred_region
          %s1304 = sand.u32 %s256, 1
          %s1305 = scalar_lea.sflag [#allocation4], %s1304
          %s1306 = sand.u32 %s256, 1
          %s1307 = smul.addr %s1306, 8
          %s1308 = scalar_lea.vmem [#allocation14], %s1307
          %1309 = dma.done %s1305, 128
        $region100: #{tlstm_cell.1} parent=95 // pred_fallthru
          _
        // Predicated region
        $region101: #{tlstm_cell.1} parent=95 // pred_check
          %p1310 = pneg %p297
        $region102: #{tlstm_cell.1} parent=95 // pred_check_branch
          %1312 = sbr.rel (%p1310) target = $region104
        $region103: #{tlstm_cell.1} parent=95 // pred_region
          %s1313 = sand.u32 %s282, 1
          %s1314 = scalar_lea.sflag [#allocation16], %s1313
          %s1315 = sand.u32 %s282, 1
          %s1316 = smul.addr %s1315, 8
          %s1317 = scalar_lea.vmem [#allocation15], %s1316
          %1318 = dma.done %s1314, 128
        $region104: #{tlstm_cell.1} parent=95 // pred_fallthru
          _
      $region96: #{tlstm_cell.1} parent=5 // pred_fallthru
        _
    $region6: #{tlstm_cell.1} parent=1 // loop_footer
      %s37 = sadd.s32 1, %s33
    $region7: #{tlstm_cell.1} parent=1 // loop_footer_branch
      %32 = sbr.rel target = $region3
    $region8: #{tlstm_cell.1} parent=1 // loop_exit
      _
    %1319 = vsyncpa [#allocation3], 1
    %s1320 = scalar_lea.sflag [#allocation3], 1
    %1321 = vsyncpa %s1320, 1
    %1322 = vsyncpa [#allocation6], 1
    %s1323 = scalar_lea.sflag [#allocation6], 1
    %1324 = vsyncpa %s1323, 1
    %1325 = vsyncpa [#allocation9], 1
    %s1326 = scalar_lea.sflag [#allocation9], 1
    %1327 = vsyncpa %s1326, 1
    %1328 = vsyncpa [#allocation12], 1
    %1329 = vsyncpa [#allocation4], 1
    %s1330 = scalar_lea.sflag [#allocation4], 1
    %1331 = vsyncpa %s1330, 1
    %1332 = vsyncpa [#allocation16], 1
    %s1333 = scalar_lea.sflag [#allocation16], 1
    %1334 = vsyncpa %s1333, 1

</llo_original>
